<compile_context>
chip_gen: v5e
topology: v5e:2x2
jax: 0.10.0
libtpu: 0.0.40
codegen_flags: <defaults>
</compile_context>

<pallas_src>
import functools

import jax
import jax.numpy as jnp
from jax.experimental import pallas as pl
from jax.experimental.pallas import tpu as pltpu

LEAKY_SLOPE = 0.01  # torch.nn.LeakyReLU default negative_slope
LANE = 128          # TPU lane width     (last-dim tiling unit)
SUBLANE = 8         # TPU sublane width  (second-to-last-dim tiling unit)


def _round_up(x, m):
    return (x + m - 1) // m * m


# ----------------------------------------------------------------------------- kernel
def _fused_mlp_kernel(x_ref, *refs, num_layers, matmul_dtype):
    """All MLP layers in one kernel body.

    refs = (w_0, b_0, w_1, b_1, ..., w_{L-1}, b_{L-1}, o_ref); every ref is a VMEM tile.
    Layer i computes y = h @ w_i + b_i; LeakyReLU on every layer except the last.
    Feature dims are pre-padded to multiples of 128 with zeros, so the padded columns
    stay exactly zero through the whole chain and the math matches the unpadded net.
    """
    param_refs = refs[: 2 * num_layers]
    o_ref = refs[2 * num_layers]

    h = x_ref[...].astype(jnp.float32)
    for i in range(num_layers):
        w = param_refs[2 * i][...]
        b = param_refs[2 * i + 1][...]            # (1, d_out_pad): broadcasts over rows
        if matmul_dtype is not None:              # e.g. bf16 MXU operands on v6e / v7x
            lhs, rhs = h.astype(matmul_dtype), w.astype(matmul_dtype)
        else:
            lhs, rhs = h, w
        y = jnp.dot(lhs, rhs, preferred_element_type=jnp.float32)
        y = y + b.astype(jnp.float32)             # f32 VPU epilogue (v5e-safe)
        if i < num_layers - 1:                    # hidden layers: LeakyReLU
            y = jnp.where(y > 0, y, LEAKY_SLOPE * y)
        h = y
    o_ref[...] = h.astype(o_ref.dtype)            # lane-dense, unmasked store


# --------------------------------------------------------------------------- wrappers
def init_simple_network(key, input_dim, output_dim, hidden_layer_dims, dtype=jnp.float32):
    """Deterministic parameter init matching nn.Linear layer shapes.

    Weights are stored as (in_features, out_features) so y = x @ W + b, equivalent to
    PyTorch's x @ W_pt.T + b with W_pt of shape (out, in).
    """
    dims = [input_dim] + list(hidden_layer_dims)
    hidden = []
    for i in range(len(dims) - 1):
        key, kw, kb = jax.random.split(key, 3)
        w = jax.random.normal(kw, (dims[i], dims[i + 1]), dtype) * 0.1
        b = jax.random.normal(kb, (dims[i + 1],), dtype) * 0.1
        hidden.append((w, b))
    key, kw, kb = jax.random.split(key, 3)
    w_out = jax.random.normal(kw, (dims[-1], output_dim), dtype) * 0.1
    b_out = jax.random.normal(kb, (output_dim,), dtype) * 0.1
    return hidden, (w_out, b_out)


def prepare_simple_network_params(hidden_params, out_params):
    """Zero-pad every layer's (W, b) to lane-dense widths (multiples of 128) ONCE."""
    layers = list(hidden_params) + [out_params]
    padded = []
    for w, b in layers:
        d_in, d_out = w.shape
        d_in_p, d_out_p = _round_up(d_in, LANE), _round_up(d_out, LANE)
        w_p = jnp.zeros((d_in_p, d_out_p), jnp.float32)
        w_p = w_p.at[:d_in, :d_out].set(w.astype(jnp.float32))
        b_p = jnp.zeros((1, d_out_p), jnp.float32)
        b_p = b_p.at[:, :d_out].set(b.reshape(1, -1).astype(jnp.float32))
        padded.append((w_p, b_p))
    output_dim = layers[-1][0].shape[1]
    return padded, output_dim


def simple_network_forward(fea, padded_params, output_dim, *, block_m=512,
                           matmul_dtype=None):
    """Fused forward pass: fea (batch, input_dim) -> (batch, output_dim)."""
    orig_dtype = fea.dtype
    batch, input_dim = fea.shape
    num_layers = len(padded_params)
    in_pad = padded_params[0][0].shape[0]
    out_pad = padded_params[-1][0].shape[1]

    # Batch tiling: sublane-aligned tile for small batches, block_m rows otherwise.
    tm = block_m if batch >= block_m else _round_up(batch, SUBLANE)
    batch_pad = _round_up(batch, tm)
    x_p = jnp.zeros((batch_pad, in_pad), jnp.float32)
    x_p = x_p.at[:batch, :input_dim].set(fea.astype(jnp.float32))

    grid = (batch_pad // tm,)
    vmem = pltpu.MemorySpace.VMEM

    in_specs = [pl.BlockSpec((tm, in_pad), lambda i: (i, 0), memory_space=vmem)]
    flat_args = [x_p]
    for w_p, b_p in padded_params:
        # Weights/biases: full-array blocks pinned across all grid steps (VMEM-resident).
        in_specs.append(pl.BlockSpec(w_p.shape, lambda i: (0, 0), memory_space=vmem))
        in_specs.append(pl.BlockSpec(b_p.shape, lambda i: (0, 0), memory_space=vmem))
        flat_args += [w_p, b_p]
    out_spec = pl.BlockSpec((tm, out_pad), lambda i: (i, 0), memory_space=vmem)

    flops = 2 * batch_pad * sum(w.shape[0] * w.shape[1] for w, _ in padded_params)
    bytes_accessed = 4 * (x_p.size + batch_pad * out_pad
                          + sum(w.size + b.size for w, b in padded_params))
    cost = pl.CostEstimate(flops=flops, transcendentals=0,
                           bytes_accessed=bytes_accessed)

    out_p = pl.pallas_call(
        functools.partial(_fused_mlp_kernel, num_layers=num_layers,
                          matmul_dtype=matmul_dtype),
        out_shape=jax.ShapeDtypeStruct((batch_pad, out_pad), jnp.float32),
        grid=grid,
        in_specs=in_specs,
        out_specs=out_spec,
        compiler_params=pltpu.CompilerParams(dimension_semantics=("parallel",)),
        cost_estimate=cost,
    )(*flat_args)

    # Carve the valid rows/columns out of the lane-dense padded slab.
    return out_p[:batch, :output_dim].astype(orig_dtype)


if __name__ == "__main__":
    key = jax.random.PRNGKey(0)

    batch = 8
    input_dim = 16
    hidden_layer_dims = [32, 64]
    output_dim = 8

    key, kp, kx = jax.random.split(key, 3)
    hidden_params, out_params = init_simple_network(
        kp, input_dim, output_dim, hidden_layer_dims
    )
    fea = jax.random.normal(kx, (batch, input_dim), jnp.float32)

    # Pad parameters once at "init" time, then run the single fused kernel.
    padded_params, out_dim = prepare_simple_network_params(hidden_params, out_params)
    out = simple_network_forward(fea, padded_params, out_dim)
    out = jax.block_until_ready(out)

    # Cross-check against plain-JAX reference of the same math.
    ref = fea
    for w, b in hidden_params:
        ref = ref @ w + b
        ref = jnp.where(ref > 0, ref, LEAKY_SLOPE * ref)
    ref = ref @ out_params[0] + out_params[1]

    assert out.shape == (batch, output_dim)
    assert jnp.allclose(out, ref, atol=1e-5, rtol=1e-5)

    print("KERNEL_OK")
</pallas_src>

<mosaic_0001>
module attributes {stable_mosaic.version = 11 : i64} {
  func.func @_fused_mlp_kernel(%arg0: i32, %arg1: memref<8x128xf32, #tpu.memory_space<vmem>>, %arg2: memref<128x128xf32, #tpu.memory_space<vmem>>, %arg3: memref<1x128xf32, #tpu.memory_space<vmem>>, %arg4: memref<128x128xf32, #tpu.memory_space<vmem>>, %arg5: memref<1x128xf32, #tpu.memory_space<vmem>>, %arg6: memref<128x128xf32, #tpu.memory_space<vmem>>, %arg7: memref<1x128xf32, #tpu.memory_space<vmem>>, %arg8: memref<8x128xf32, #tpu.memory_space<vmem>>) attributes {dimension_semantics = [#tpu.dimension_semantics<parallel>], iteration_bounds = array<i64: 1>, scalar_prefetch = 0 : i64, scratch_operands = 0 : i64, tpu.core_type = #tpu.core_type<tc>, window_params = [{transform_indices = @transform_0, window_bounds = array<i64: 8, 128>}, {pipeline_mode = #tpu.pipeline_mode<synchronous>, transform_indices = @transform_1, window_bounds = array<i64: 128, 128>}, {pipeline_mode = #tpu.pipeline_mode<synchronous>, transform_indices = @transform_2, window_bounds = array<i64: 1, 128>}, {pipeline_mode = #tpu.pipeline_mode<synchronous>, transform_indices = @transform_3, window_bounds = array<i64: 128, 128>}, {pipeline_mode = #tpu.pipeline_mode<synchronous>, transform_indices = @transform_4, window_bounds = array<i64: 1, 128>}, {pipeline_mode = #tpu.pipeline_mode<synchronous>, transform_indices = @transform_5, window_bounds = array<i64: 128, 128>}, {pipeline_mode = #tpu.pipeline_mode<synchronous>, transform_indices = @transform_6, window_bounds = array<i64: 1, 128>}, {transform_indices = @transform_7, window_bounds = array<i64: 8, 128>}]} {
    %c0 = arith.constant 0 : index
    %c0_0 = arith.constant 0 : index
    %0 = vector.load %arg1[%c0, %c0_0] : memref<8x128xf32, #tpu.memory_space<vmem>>, vector<8x128xf32>
    %c0_1 = arith.constant 0 : index
    %c0_2 = arith.constant 0 : index
    %1 = vector.load %arg2[%c0_1, %c0_2] : memref<128x128xf32, #tpu.memory_space<vmem>>, vector<128x128xf32>
    %c0_3 = arith.constant 0 : index
    %c0_4 = arith.constant 0 : index
    %2 = vector.load %arg3[%c0_3, %c0_4] : memref<1x128xf32, #tpu.memory_space<vmem>>, vector<1x128xf32>
    %cst = arith.constant dense<0.000000e+00> : vector<8x128xf32>
    %3 = tpu.matmul %0, %1, %cst {dimension_numbers = #tpu.dot_dimension_numbers<[1], [0], [0], [1], [0, 0, 1, 1], [], []>} : vector<8x128xf32>, vector<128x128xf32>, vector<8x128xf32> -> vector<8x128xf32>
    %4 = vector.broadcast %2 : vector<1x128xf32> to vector<8x128xf32>
    %5 = arith.addf %3, %4 : vector<8x128xf32>
    %cst_5 = arith.constant 0.000000e+00 : f32
    %6 = vector.broadcast %cst_5 : f32 to vector<8x128xf32>
    %7 = arith.cmpf ogt, %5, %6 : vector<8x128xf32>
    %cst_6 = arith.constant 0.00999999977 : f32
    %8 = vector.broadcast %cst_6 : f32 to vector<8x128xf32>
    %9 = arith.mulf %8, %5 : vector<8x128xf32>
    %10 = arith.select %7, %5, %9 : vector<8x128xi1>, vector<8x128xf32>
    %c0_7 = arith.constant 0 : index
    %c0_8 = arith.constant 0 : index
    %11 = vector.load %arg4[%c0_7, %c0_8] : memref<128x128xf32, #tpu.memory_space<vmem>>, vector<128x128xf32>
    %c0_9 = arith.constant 0 : index
    %c0_10 = arith.constant 0 : index
    %12 = vector.load %arg5[%c0_9, %c0_10] : memref<1x128xf32, #tpu.memory_space<vmem>>, vector<1x128xf32>
    %cst_11 = arith.constant dense<0.000000e+00> : vector<8x128xf32>
    %13 = tpu.matmul %10, %11, %cst_11 {dimension_numbers = #tpu.dot_dimension_numbers<[1], [0], [0], [1], [0, 0, 1, 1], [], []>} : vector<8x128xf32>, vector<128x128xf32>, vector<8x128xf32> -> vector<8x128xf32>
    %14 = vector.broadcast %12 : vector<1x128xf32> to vector<8x128xf32>
    %15 = arith.addf %13, %14 : vector<8x128xf32>
    %cst_12 = arith.constant 0.000000e+00 : f32
    %16 = vector.broadcast %cst_12 : f32 to vector<8x128xf32>
    %17 = arith.cmpf ogt, %15, %16 : vector<8x128xf32>
    %cst_13 = arith.constant 0.00999999977 : f32
    %18 = vector.broadcast %cst_13 : f32 to vector<8x128xf32>
    %19 = arith.mulf %18, %15 : vector<8x128xf32>
    %20 = arith.select %17, %15, %19 : vector<8x128xi1>, vector<8x128xf32>
    %c0_14 = arith.constant 0 : index
    %c0_15 = arith.constant 0 : index
    %21 = vector.load %arg6[%c0_14, %c0_15] : memref<128x128xf32, #tpu.memory_space<vmem>>, vector<128x128xf32>
    %c0_16 = arith.constant 0 : index
    %c0_17 = arith.constant 0 : index
    %22 = vector.load %arg7[%c0_16, %c0_17] : memref<1x128xf32, #tpu.memory_space<vmem>>, vector<1x128xf32>
    %cst_18 = arith.constant dense<0.000000e+00> : vector<8x128xf32>
    %23 = tpu.matmul %20, %21, %cst_18 {dimension_numbers = #tpu.dot_dimension_numbers<[1], [0], [0], [1], [0, 0, 1, 1], [], []>} : vector<8x128xf32>, vector<128x128xf32>, vector<8x128xf32> -> vector<8x128xf32>
    %24 = vector.broadcast %22 : vector<1x128xf32> to vector<8x128xf32>
    %25 = arith.addf %23, %24 : vector<8x128xf32>
    %c0_19 = arith.constant 0 : index
    %c0_20 = arith.constant 0 : index
    %26 = vector.load %arg8[%c0_19, %c0_20] : memref<8x128xf32, #tpu.memory_space<vmem>>, vector<8x128xf32>
    tpu.vector_store %arg8[%c0_19, %c0_20], %25 {strides = array<i32>} : memref<8x128xf32, #tpu.memory_space<vmem>>, vector<8x128xf32>,
    return
  }
  func.func @transform_0(%arg0: i32) -> (i32, i32) {
    %c0_i32 = arith.constant 0 : i32
    %c0_i32_0 = arith.constant 0 : i32
    return %arg0, %c0_i32 : i32, i32
  }
  func.func @transform_1(%arg0: i32) -> (i32, i32) {
    %c0_i32 = arith.constant 0 : i32
    %c0_i32_0 = arith.constant 0 : i32
    %c0_i32_1 = arith.constant 0 : i32
    return %c0_i32, %c0_i32_0 : i32, i32
  }
  func.func @transform_2(%arg0: i32) -> (i32, i32) {
    %c0_i32 = arith.constant 0 : i32
    %c0_i32_0 = arith.constant 0 : i32
    %c0_i32_1 = arith.constant 0 : i32
    return %c0_i32, %c0_i32_0 : i32, i32
  }
  func.func @transform_3(%arg0: i32) -> (i32, i32) {
    %c0_i32 = arith.constant 0 : i32
    %c0_i32_0 = arith.constant 0 : i32
    %c0_i32_1 = arith.constant 0 : i32
    return %c0_i32, %c0_i32_0 : i32, i32
  }
  func.func @transform_4(%arg0: i32) -> (i32, i32) {
    %c0_i32 = arith.constant 0 : i32
    %c0_i32_0 = arith.constant 0 : i32
    %c0_i32_1 = arith.constant 0 : i32
    return %c0_i32, %c0_i32_0 : i32, i32
  }
  func.func @transform_5(%arg0: i32) -> (i32, i32) {
    %c0_i32 = arith.constant 0 : i32
    %c0_i32_0 = arith.constant 0 : i32
    %c0_i32_1 = arith.constant 0 : i32
    return %c0_i32, %c0_i32_0 : i32, i32
  }
  func.func @transform_6(%arg0: i32) -> (i32, i32) {
    %c0_i32 = arith.constant 0 : i32
    %c0_i32_0 = arith.constant 0 : i32
    %c0_i32_1 = arith.constant 0 : i32
    return %c0_i32, %c0_i32_0 : i32, i32
  }
  func.func @transform_7(%arg0: i32) -> (i32, i32) {
    %c0_i32 = arith.constant 0 : i32
    %c0_i32_0 = arith.constant 0 : i32
    return %arg0, %c0_i32 : i32, i32
  }
}

</mosaic_0001>

<llo_original>
// kernel: tpu_custom_call.1
$region0: #{tpu_custom_call.1}
  #allocation0 [shape = 'u32[]', space=smem, size = 0x4, offset = 0x4, fixed_abs, tag = 'smem constant byte address 0x4 - core index']
  #allocation1 [shape = 'u32[72,128]{1,0:T(1,128)}', space=vmem, size = 0x9000, scoped, tag = 'internal scratch']
  %s0 = inlined_call_operand.hbm [shape: f32[8,128], index: 0, kind: input, shape index: {}]
  %s1 = inlined_call_operand.hbm [shape: f32[128,128], index: 1, kind: input, shape index: {}]
  %s2 = inlined_call_operand.vmem [shape: f32[1,128], index: 2, kind: input, shape index: {}]
  %s3 = inlined_call_operand.hbm [shape: f32[128,128], index: 3, kind: input, shape index: {}]
  %s4 = inlined_call_operand.vmem [shape: f32[1,128], index: 4, kind: input, shape index: {}]
  %s5 = inlined_call_operand.hbm [shape: f32[128,128], index: 5, kind: input, shape index: {}]
  %s6 = inlined_call_operand.vmem [shape: f32[1,128], index: 6, kind: input, shape index: {}]
  %s7 = inlined_call_operand.hbm [shape: f32[8,128], index: 7, kind: output, shape index: {}]
  %s8 = sld [smem:[#allocation0]]
  $region54: #{tpu_custom_call.1} parent=0
    _
  %s10 = ssub.s32 1, %s8
  %s11 = scalar_select 0, %s10, %s8
  $region1: #{tpu_custom_call.1} parent=0
    #allocation2 [shape = 'u8[4096]{0}', space=vmem, size = 0x1000, scoped, tag = 'input window, operand 0, single buffered']
    #allocation3 [shape = 's32[1]{0}', space=sflag, size = 0x4, scoped, tag = 'scoped memory for tpu_custom_call.1']
    #allocation4 [shape = 's32[1]{0}', space=sflag, size = 0x4, scoped, tag = 'scoped memory for tpu_custom_call.1']
    #allocation5 [shape = 'u8[65536]{0}', space=vmem, size = 0x10000, scoped, tag = 'input window, operand 1, single buffered']
    #allocation6 [shape = 's32[1]{0}', space=sflag, size = 0x4, scoped, tag = 'scoped memory for tpu_custom_call.1']
    #allocation7 [shape = 'u8[65536]{0}', space=vmem, size = 0x10000, scoped, tag = 'input window, operand 3, single buffered']
    #allocation8 [shape = 'u8[65536]{0}', space=vmem, size = 0x10000, scoped, tag = 'input window, operand 5, single buffered']
    #allocation9 [shape = 's32[1]{0}', space=sflag, size = 0x4, scoped, tag = 'scoped memory for tpu_custom_call.1']
    #allocation10 [shape = 'u8[4096]{0}', space=vmem, size = 0x1000, scoped, tag = 'output window, operand 0, single buffered']
    %12 = vsyncpa [#allocation3], 0
    %13 = vsyncpa [#allocation6], 0
    %14 = vsyncpa [#allocation9], 0
    %15 = vsyncpa [#allocation4], 0
    // Predicated region
    $region2: #{tpu_custom_call.1} parent=1 // pred_check
      _
    $region3: #{tpu_custom_call.1} parent=1 // pred_check_branch
      %17 = sbr.rel (0) target = $region5
    $region4: #{tpu_custom_call.1} parent=1 // pred_region
      %19 = vsyncadd [#allocation3], 0
      %s21 = sshll.u32 %s0, 4
      %s22 = int_to_ptr.hbm [resolvable:$true] %s21
      %s23 = sshll.u32 [#allocation2], 4
      %s24 = int_to_ptr.vmem [resolvable:$true] %s23
      %26 = dma.hbm_to_vmem [thread:$0]  %s22, 128, %s24, [#allocation3]
    $region5: #{tpu_custom_call.1} parent=1 // pred_fallthru
      _
    // Predicated region
    $region6: #{tpu_custom_call.1} parent=1 // pred_check
      _
    $region7: #{tpu_custom_call.1} parent=1 // pred_check_branch
      %28 = sbr.rel (0) target = $region9
    $region8: #{tpu_custom_call.1} parent=1 // pred_region
      %30 = vsyncadd [#allocation6], 0
      %s31 = sshll.u32 %s1, 4
      %s32 = int_to_ptr.hbm [resolvable:$true] %s31
      %s33 = sshll.u32 [#allocation5], 4
      %s34 = int_to_ptr.vmem [resolvable:$true] %s33
      %39 = dma.hbm_to_vmem [thread:$0]  %s32, 2048, %s34, [#allocation6], 128, 128, 8
    $region9: #{tpu_custom_call.1} parent=1 // pred_fallthru
      _
    // Predicated region
    $region10: #{tpu_custom_call.1} parent=1 // pred_check
      _
    $region11: #{tpu_custom_call.1} parent=1 // pred_check_branch
      %41 = sbr.rel (0) target = $region13
    $region12: #{tpu_custom_call.1} parent=1 // pred_region
      _
    $region13: #{tpu_custom_call.1} parent=1 // pred_fallthru
      _
    // Predicated region
    $region14: #{tpu_custom_call.1} parent=1 // pred_check
      _
    $region15: #{tpu_custom_call.1} parent=1 // pred_check_branch
      %43 = sbr.rel (0) target = $region17
    $region16: #{tpu_custom_call.1} parent=1 // pred_region
      %45 = vsyncadd [#allocation6], 0
      %s46 = sshll.u32 %s3, 4
      %s47 = int_to_ptr.hbm [resolvable:$true] %s46
      %s48 = sshll.u32 [#allocation7], 4
      %s49 = int_to_ptr.vmem [resolvable:$true] %s48
      %54 = dma.hbm_to_vmem [thread:$0]  %s47, 2048, %s49, [#allocation6], 128, 128, 8
    $region17: #{tpu_custom_call.1} parent=1 // pred_fallthru
      _
    // Predicated region
    $region18: #{tpu_custom_call.1} parent=1 // pred_check
      _
    $region19: #{tpu_custom_call.1} parent=1 // pred_check_branch
      %56 = sbr.rel (0) target = $region21
    $region20: #{tpu_custom_call.1} parent=1 // pred_region
      _
    $region21: #{tpu_custom_call.1} parent=1 // pred_fallthru
      _
    // Predicated region
    $region22: #{tpu_custom_call.1} parent=1 // pred_check
      _
    $region23: #{tpu_custom_call.1} parent=1 // pred_check_branch
      %58 = sbr.rel (0) target = $region25
    $region24: #{tpu_custom_call.1} parent=1 // pred_region
      %60 = vsyncadd [#allocation9], 0
      %s61 = sshll.u32 %s5, 4
      %s62 = int_to_ptr.hbm [resolvable:$true] %s61
      %s63 = sshll.u32 [#allocation8], 4
      %s64 = int_to_ptr.vmem [resolvable:$true] %s63
      %69 = dma.hbm_to_vmem [thread:$0]  %s62, 2048, %s64, [#allocation9], 128, 128, 8
    $region25: #{tpu_custom_call.1} parent=1 // pred_fallthru
      _
    // Predicated region
    $region26: #{tpu_custom_call.1} parent=1 // pred_check
      _
    $region27: #{tpu_custom_call.1} parent=1 // pred_check_branch
      %71 = sbr.rel (0) target = $region29
    $region28: #{tpu_custom_call.1} parent=1 // pred_region
      _
    $region29: #{tpu_custom_call.1} parent=1 // pred_fallthru
      _
    // Predicated region
    $region30: #{tpu_custom_call.1} parent=1 // pred_check
      _
    $region31: #{tpu_custom_call.1} parent=1 // pred_check_branch
      %73 = sbr.rel (0) target = $region33
    $region32: #{tpu_custom_call.1} parent=1 // pred_region
      %75 = dma.done [#allocation3], 128
    $region33: #{tpu_custom_call.1} parent=1 // pred_fallthru
      _
    // Predicated region
    $region34: #{tpu_custom_call.1} parent=1 // pred_check
      _
    $region35: #{tpu_custom_call.1} parent=1 // pred_check_branch
      %77 = sbr.rel (0) target = $region37
    $region36: #{tpu_custom_call.1} parent=1 // pred_region
      %79 = dma.done [#allocation6], 2048
    $region37: #{tpu_custom_call.1} parent=1 // pred_fallthru
      _
    // Predicated region
    $region38: #{tpu_custom_call.1} parent=1 // pred_check
      _
    $region39: #{tpu_custom_call.1} parent=1 // pred_check_branch
      %81 = sbr.rel (0) target = $region41
    $region40: #{tpu_custom_call.1} parent=1 // pred_region
      %83 = dma.done [#allocation6], 2048
    $region41: #{tpu_custom_call.1} parent=1 // pred_fallthru
      _
    // Predicated region
    $region42: #{tpu_custom_call.1} parent=1 // pred_check
      _
    $region43: #{tpu_custom_call.1} parent=1 // pred_check_branch
      %85 = sbr.rel (0) target = $region45
    $region44: #{tpu_custom_call.1} parent=1 // pred_region
      %87 = dma.done [#allocation9], 2048
    $region45: #{tpu_custom_call.1} parent=1 // pred_fallthru
      _
    %v88 = vld [vmem:[#allocation2] sm:$0xff]
    %v89 = vld [vmem:[#allocation5] sm:$0xff]
    %v90 = vld [vmem:[#allocation5 + $0x8] sm:$0xff]
    %v91 = vld [vmem:[#allocation5 + $0x10] sm:$0xff]
    %v92 = vld [vmem:[#allocation5 + $0x18] sm:$0xff]
    %v93 = vld [vmem:[#allocation5 + $0x20] sm:$0xff]
    %v94 = vld [vmem:[#allocation5 + $0x28] sm:$0xff]
    %v95 = vld [vmem:[#allocation5 + $0x30] sm:$0xff]
    %v96 = vld [vmem:[#allocation5 + $0x38] sm:$0xff]
    %v97 = vld [vmem:[#allocation5 + $0x40] sm:$0xff]
    %v98 = vld [vmem:[#allocation5 + $0x48] sm:$0xff]
    %v99 = vld [vmem:[#allocation5 + $0x50] sm:$0xff]
    %v100 = vld [vmem:[#allocation5 + $0x58] sm:$0xff]
    %v101 = vld [vmem:[#allocation5 + $0x60] sm:$0xff]
    %v102 = vld [vmem:[#allocation5 + $0x68] sm:$0xff]
    %v103 = vld [vmem:[#allocation5 + $0x70] sm:$0xff]
    %v104 = vld [vmem:[#allocation5 + $0x78] sm:$0xff]
    %v105 = vld [vmem:[%s2] sm:$0x1]
    %v107 = vperm.slane %v105, 0
    %109 = vmatpush.msra.mxu0 %v104
    %110 = vmatpush.msra.mxu0 %v103
    %111 = vmatpush.msra.mxu0 %v102
    %112 = vmatpush.msra.mxu0 %v101
    %113 = vmatpush.msra.mxu0 %v100
    %114 = vmatpush.msra.mxu0 %v99
    %115 = vmatpush.msra.mxu0 %v98
    %116 = vmatpush.msra.mxu0 %v97
    %117 = vmatpush.msra.mxu0 %v96
    %118 = vmatpush.msra.mxu0 %v95
    %119 = vmatpush.msra.mxu0 %v94
    %120 = vmatpush.msra.mxu0 %v93
    %121 = vmatpush.msra.mxu0 %v92
    %122 = vmatpush.msra.mxu0 %v91
    %123 = vmatpush.msra.mxu0 %v90
    %124 = vmatpush.msra.mxu0 %v89
    %125 = vmatmul.f32.gmra.mxu0 %v88
    %v126 = vpop.f32.mrf.mxu0
    %v127 = vadd.f32 %v107, %v126
    %128 = vdwg.mxu0
    %vm129 = vcmp.gt.f32.partialorder %v127, 0.0
    %v130 = vmul.f32 %v127, 0.01
    %v131 = vsel %vm129, %v127, %v130
    %v132 = vld [vmem:[#allocation7] sm:$0xff]
    %v133 = vld [vmem:[#allocation7 + $0x8] sm:$0xff]
    %v134 = vld [vmem:[#allocation7 + $0x10] sm:$0xff]
    %v135 = vld [vmem:[#allocation7 + $0x18] sm:$0xff]
    %v136 = vld [vmem:[#allocation7 + $0x20] sm:$0xff]
    %v137 = vld [vmem:[#allocation7 + $0x28] sm:$0xff]
    %v138 = vld [vmem:[#allocation7 + $0x30] sm:$0xff]
    %v139 = vld [vmem:[#allocation7 + $0x38] sm:$0xff]
    %v140 = vld [vmem:[#allocation7 + $0x40] sm:$0xff]
    %v141 = vld [vmem:[#allocation7 + $0x48] sm:$0xff]
    %v142 = vld [vmem:[#allocation7 + $0x50] sm:$0xff]
    %v143 = vld [vmem:[#allocation7 + $0x58] sm:$0xff]
    %v144 = vld [vmem:[#allocation7 + $0x60] sm:$0xff]
    %v145 = vld [vmem:[#allocation7 + $0x68] sm:$0xff]
    %v146 = vld [vmem:[#allocation7 + $0x70] sm:$0xff]
    %v147 = vld [vmem:[#allocation7 + $0x78] sm:$0xff]
    %v148 = vld [vmem:[%s4] sm:$0x1]
    %v150 = vperm.slane %v148, 0
    %152 = vmatpush.msra.mxu0 %v147
    %153 = vmatpush.msra.mxu0 %v146
    %154 = vmatpush.msra.mxu0 %v145
    %155 = vmatpush.msra.mxu0 %v144
    %156 = vmatpush.msra.mxu0 %v143
    %157 = vmatpush.msra.mxu0 %v142
    %158 = vmatpush.msra.mxu0 %v141
    %159 = vmatpush.msra.mxu0 %v140
    %160 = vmatpush.msra.mxu0 %v139
    %161 = vmatpush.msra.mxu0 %v138
    %162 = vmatpush.msra.mxu0 %v137
    %163 = vmatpush.msra.mxu0 %v136
    %164 = vmatpush.msra.mxu0 %v135
    %165 = vmatpush.msra.mxu0 %v134
    %166 = vmatpush.msra.mxu0 %v133
    %167 = vmatpush.msra.mxu0 %v132
    %168 = vmatmul.f32.gmra.mxu0 %v131
    %v169 = vpop.f32.mrf.mxu0
    %v170 = vadd.f32 %v150, %v169
    %171 = vdwg.mxu0
    %vm172 = vcmp.gt.f32.partialorder %v170, 0.0
    %v173 = vmul.f32 %v170, 0.01
    %v174 = vsel %vm172, %v170, %v173
    %v175 = vld [vmem:[#allocation8] sm:$0xff]
    %v176 = vld [vmem:[#allocation8 + $0x8] sm:$0xff]
    %v177 = vld [vmem:[#allocation8 + $0x10] sm:$0xff]
    %v178 = vld [vmem:[#allocation8 + $0x18] sm:$0xff]
    %v179 = vld [vmem:[#allocation8 + $0x20] sm:$0xff]
    %v180 = vld [vmem:[#allocation8 + $0x28] sm:$0xff]
    %v181 = vld [vmem:[#allocation8 + $0x30] sm:$0xff]
    %v182 = vld [vmem:[#allocation8 + $0x38] sm:$0xff]
    %v183 = vld [vmem:[#allocation8 + $0x40] sm:$0xff]
    %v184 = vld [vmem:[#allocation8 + $0x48] sm:$0xff]
    %v185 = vld [vmem:[#allocation8 + $0x50] sm:$0xff]
    %v186 = vld [vmem:[#allocation8 + $0x58] sm:$0xff]
    %v187 = vld [vmem:[#allocation8 + $0x60] sm:$0xff]
    %v188 = vld [vmem:[#allocation8 + $0x68] sm:$0xff]
    %v189 = vld [vmem:[#allocation8 + $0x70] sm:$0xff]
    %v190 = vld [vmem:[#allocation8 + $0x78] sm:$0xff]
    %v191 = vld [vmem:[%s6] sm:$0x1]
    %v193 = vperm.slane %v191, 0
    %195 = vmatpush.msra.mxu0 %v190
    %196 = vmatpush.msra.mxu0 %v189
    %197 = vmatpush.msra.mxu0 %v188
    %198 = vmatpush.msra.mxu0 %v187
    %199 = vmatpush.msra.mxu0 %v186
    %200 = vmatpush.msra.mxu0 %v185
    %201 = vmatpush.msra.mxu0 %v184
    %202 = vmatpush.msra.mxu0 %v183
    %203 = vmatpush.msra.mxu0 %v182
    %204 = vmatpush.msra.mxu0 %v181
    %205 = vmatpush.msra.mxu0 %v180
    %206 = vmatpush.msra.mxu0 %v179
    %207 = vmatpush.msra.mxu0 %v178
    %208 = vmatpush.msra.mxu0 %v177
    %209 = vmatpush.msra.mxu0 %v176
    %210 = vmatpush.msra.mxu0 %v175
    %211 = vmatmul.f32.gmra.mxu0 %v174
    %v212 = vpop.f32.mrf.mxu0
    %v213 = vadd.f32 %v193, %v212
    %214 = vdwg.mxu0
    %215 = vst [vmem:[#allocation10] sm:$0xff] %v213
    // Predicated region
    $region46: #{tpu_custom_call.1} parent=1 // pred_check
      _
    $region47: #{tpu_custom_call.1} parent=1 // pred_check_branch
      %217 = sbr.rel (0) target = $region49
    $region48: #{tpu_custom_call.1} parent=1 // pred_region
      %219 = vsyncadd [#allocation4], 0
      %s221 = sshll.u32 [#allocation10], 4
      %s222 = int_to_ptr.vmem [resolvable:$true] %s221
      %s223 = sshll.u32 %s7, 4
      %s224 = int_to_ptr.hbm [resolvable:$true] %s223
      %226 = dma.vmem_to_hbm [thread:$0]  %s222, 128, %s224, [#allocation4]
    $region49: #{tpu_custom_call.1} parent=1 // pred_fallthru
      _
    // Predicated region
    $region50: #{tpu_custom_call.1} parent=1 // pred_check
      _
    $region51: #{tpu_custom_call.1} parent=1 // pred_check_branch
      %228 = sbr.rel (0) target = $region53
    $region52: #{tpu_custom_call.1} parent=1 // pred_region
      %230 = dma.done [#allocation4], 128
    $region53: #{tpu_custom_call.1} parent=1 // pred_fallthru
      _
    %231 = vsyncpa [#allocation3], 1
    %232 = vsyncpa [#allocation6], 1
    %233 = vsyncpa [#allocation9], 1
    %234 = vsyncpa [#allocation4], 1

</llo_original>
